<compile_context>
chip_gen: v5e
topology: v5e:2x2
jax: 0.10.0
libtpu: 0.0.40
codegen_flags: <defaults>
</compile_context>

<pallas_src>
import functools

import jax
import jax.numpy as jnp
from jax.experimental import pallas as pl
from jax.experimental.pallas import tpu as pltpu

_NEG_BIG = -1e30  # finite "minus infinity" sentinel (avoids inf-inf NaNs)


def _ntxent_kernel(row_ref, col_ref, out_ref, pos_ref, l_ref, m_ref,
                   *, inv_temp, batch, tile, use_cosine):
    rb = pl.program_id(0)            # row-block index     ("parallel")
    cb = pl.program_id(1)            # column-block index  (reduction, last)
    n_cb = pl.num_programs(1)

    # --- first column step of this row block: init running stats
    @pl.when(cb == 0)
    def _():
        pos_ref[...] = jnp.zeros_like(pos_ref)
        l_ref[...] = jnp.zeros_like(l_ref)
        if not use_cosine:
            m_ref[...] = jnp.full(m_ref.shape, _NEG_BIG, dtype=jnp.float32)

    # --- logits tile on the MXU.  Both operands are pre-normalized (cosine
    #     path) and carry 1/sqrt(T), so s == sim / T directly.  Feature axis of
    #     both operands is contracted (flash-attention A @ B^T pattern).
    s = jax.lax.dot_general(
        row_ref[...], col_ref[...],
        dimension_numbers=(((1,), (1,)), ((), ())),
        preferred_element_type=jnp.float32)               # (tile, tile) f32

    d = (cb - rb) * tile                                  # scalar int32

    # --- positives: partner diagonal col == (row + B) mod 2B.  It intersects
    #     this tile only for a couple of (rb, cb) pairs; gate all mask work.
    partner_possible = (jnp.abs(batch - d) < tile) | (jnp.abs(batch + d) < tile)

    @pl.when(partner_possible)
    def _():
        r_loc = jax.lax.broadcasted_iota(jnp.int32, s.shape, 0)
        c_loc = jax.lax.broadcasted_iota(jnp.int32, s.shape, 1)
        delta = c_loc - r_loc
        pmask = (delta == batch - d) | (delta == -batch - d)
        pos_ref[...] += jnp.sum(jnp.where(pmask, s, 0.0),
                                axis=-1, keepdims=True)

    if use_cosine:
        # |cos sim| <= 1  =>  s <= 1/T: static logsumexp shift.  No running
        # max, no XLU row-max, no alpha rescale, no serial chain across cb.
        p = jnp.exp(s - inv_temp)                          # (tile, tile) f32
        l_ref[...] += jnp.sum(p, axis=-1, keepdims=True)

        # Self-similarity (global row == col) must be excluded from the
        # denominator; it only lands in this tile when rb == cb -> gate it.
        @pl.when(rb == cb)
        def _():
            r_loc = jax.lax.broadcasted_iota(jnp.int32, s.shape, 0)
            c_loc = jax.lax.broadcasted_iota(jnp.int32, s.shape, 1)
            diag = jnp.sum(jnp.where(r_loc == c_loc, p, 0.0),
                           axis=-1, keepdims=True)
            l_ref[...] -= diag
    else:
        # Unbounded dot-product similarity: keep the online-max path.
        r_loc = jax.lax.broadcasted_iota(jnp.int32, s.shape, 0)
        c_loc = jax.lax.broadcasted_iota(jnp.int32, s.shape, 1)
        s = jnp.where((rb == cb) & (r_loc == c_loc), jnp.float32(_NEG_BIG), s)
        m_prev = m_ref[...]
        m_new = jnp.maximum(m_prev, jnp.max(s, axis=-1, keepdims=True))
        alpha = jnp.exp(m_prev - m_new)
        l_ref[...] = alpha * l_ref[...] + jnp.sum(jnp.exp(s - m_new),
                                                  axis=-1, keepdims=True)
        m_ref[...] = m_new

    # --- last column step: finalize per-row cross entropy
    @pl.when(cb == n_cb - 1)
    def _():
        if use_cosine:
            lse = inv_temp + jnp.log(l_ref[...])
        else:
            lse = m_ref[...] + jnp.log(l_ref[...])
        out_ref[...] = lse - pos_ref[...]


def _pick_tile(n, target):
    """Largest multiple of 8 dividing n, <= target, preferring an even (>=2)
    number of row blocks so the grid's 'parallel' axis balances v7x megacore."""
    target = max(8, min(target, n))
    cands = [d for d in range(8, target + 1, 8) if n % d == 0]
    if not cands:
        return n
    even = [d for d in cands if (n // d) >= 2 and (n // d) % 2 == 0]
    if even:
        return max(even)
    multi = [d for d in cands if (n // d) >= 2]
    if multi:
        return max(multi)
    return max(cands)


def ntxent_loss(zis, zjs, *, batch_size, temperature,
                use_cosine_similarity=True, target_tile=512):
    assert zis.shape == zjs.shape and zis.shape[0] == batch_size
    B, D = zis.shape
    n = 2 * B
    assert n % 8 == 0, "2*batch_size must be a multiple of 8 (TPU sublane tiling)"

    # One-time O(n*D) prep in the wrapper: L2-normalize (cosine path), fold
    # 1/sqrt(T) into both matmul operands, cast to MXU-native bf16 so the kernel
    # streams bf16 bytes only.
    reps = jnp.concatenate([zjs, zis], axis=0).astype(jnp.float32)     # (2B, D)
    if use_cosine_similarity:
        norm_sq = jnp.sum(reps * reps, axis=-1, keepdims=True)
        reps = reps * jax.lax.rsqrt(jnp.maximum(norm_sq, 1e-16))
    reps = (reps * (float(temperature) ** -0.5)).astype(jnp.bfloat16)

    t = _pick_tile(n, target_tile)
    n_rb = n // t
    n_cb = n // t

    kernel = functools.partial(
        _ntxent_kernel,
        inv_temp=float(1.0 / temperature),
        batch=int(B),
        tile=int(t),
        use_cosine=bool(use_cosine_similarity))

    # VMEM limit derived from the chip (v7x has 64 MiB -> keep headroom),
    # instead of the previous hardcoded 32 MiB that throttled v5e/v6e tiles.
    try:
        vmem_cap = int(pltpu.get_tpu_info().vmem_capacity_bytes)
    except Exception:
        vmem_cap = 64 * 1024 * 1024
    vmem_limit = int(min(100 * 1024 * 1024, int(vmem_cap * 0.75)))

    per_row = pl.pallas_call(
        kernel,
        out_shape=jax.ShapeDtypeStruct((n, 1), jnp.float32),
        grid_spec=pltpu.PrefetchScalarGridSpec(
            num_scalar_prefetch=0,
            grid=(n_rb, n_cb),
            in_specs=[
                # row tile of reps: block index invariant in cb -> resident
                pl.BlockSpec((t, D), lambda rb, cb: (rb, 0)),
                # streamed column tile (double-buffered by the pipeline)
                pl.BlockSpec((t, D), lambda rb, cb: (cb, 0)),
            ],
            out_specs=pl.BlockSpec((t, 1), lambda rb, cb: (rb, 0)),
            scratch_shapes=[
                pltpu.VMEM((t, 1), jnp.float32),   # positives (sim / T)
                pltpu.VMEM((t, 1), jnp.float32),   # running sum-of-exp
                pltpu.VMEM((t, 1), jnp.float32),   # running max (dot-sim path)
            ],
        ),
        compiler_params=pltpu.CompilerParams(
            dimension_semantics=("parallel", "arbitrary"),
            vmem_limit_bytes=vmem_limit,
        ),
    )(reps, reps)

    # Tiny 2B-element reduction + scaling outside the kernel.
    return jnp.sum(per_row) / jnp.float32(n)


def _reference(zis, zjs, batch_size, temperature):
    """Pure-JAX f32 reference mirroring the PyTorch forward."""
    reps = jnp.concatenate([zjs, zis], axis=0).astype(jnp.float32)
    n = 2 * batch_size
    rn = reps / jnp.maximum(jnp.linalg.norm(reps, axis=-1, keepdims=True), 1e-8)
    logits = (rn @ rn.T) / temperature
    idx = jnp.arange(n)
    pos = logits[idx, (idx + batch_size) % n]
    masked = jnp.where(jnp.eye(n, dtype=bool), -jnp.inf, logits)
    lse = jax.scipy.special.logsumexp(masked, axis=-1)
    return jnp.sum(lse - pos) / n


if __name__ == "__main__":
    B, D = 8, 32
    temperature = 0.5
    key = jax.random.PRNGKey(0)
    k1, k2 = jax.random.split(key)
    zis = jax.random.normal(k1, (B, D), dtype=jnp.float32)
    zjs = jax.random.normal(k2, (B, D), dtype=jnp.float32)

    loss = ntxent_loss(zis, zjs, batch_size=B, temperature=temperature,
                       use_cosine_similarity=True)
    loss = jax.block_until_ready(loss)

    ref = _reference(zis, zjs, B, temperature)
    # bf16 MXU inputs (f32 accumulation) => compare at bf16-level tolerance.
    assert jnp.allclose(loss, ref, rtol=2e-2, atol=2e-2), (loss, ref)
    print("KERNEL_OK")
</pallas_src>

<mosaic_0001>
module attributes {stable_mosaic.version = 11 : i64} {
  func.func @_ntxent_kernel(%arg0: i32, %arg1: i32, %arg2: memref<8x32xbf16, #tpu.memory_space<vmem>>, %arg3: memref<8x32xbf16, #tpu.memory_space<vmem>>, %arg4: memref<8x1xf32, #tpu.memory_space<vmem>>, %arg5: memref<8x1xf32, #tpu.memory_space<vmem>>, %arg6: memref<8x1xf32, #tpu.memory_space<vmem>>, %arg7: memref<8x1xf32, #tpu.memory_space<vmem>>) attributes {dimension_semantics = [#tpu.dimension_semantics<parallel>, #tpu.dimension_semantics<arbitrary>], iteration_bounds = array<i64: 2, 2>, scalar_prefetch = 0 : i64, scratch_operands = 3 : i64, tpu.core_type = #tpu.core_type<tc>, window_params = [{transform_indices = @transform_0, window_bounds = array<i64: 8, 32>}, {transform_indices = @transform_1, window_bounds = array<i64: 8, 32>}, {transform_indices = @transform_2, window_bounds = array<i64: 8, 1>}]} {
    %c0_i32 = arith.constant 0 : i32
    %0 = arith.cmpi eq, %arg1, %c0_i32 : i32
    %1 = arith.extui %0 : i1 to i32
    %c0_i32_0 = arith.constant 0 : i32
    %2 = arith.cmpi ne, %1, %c0_i32_0 : i32
    scf.if %2 {
      %cst_17 = arith.constant 0.000000e+00 : f32
      %31 = vector.broadcast %cst_17 : f32 to vector<8x1xf32>
      %c0_18 = arith.constant 0 : index
      %c0_19 = arith.constant 0 : index
      %32 = vector.load %arg5[%c0_18, %c0_19] : memref<8x1xf32, #tpu.memory_space<vmem>>, vector<8x1xf32>
      tpu.vector_store %arg5[%c0_18, %c0_19], %31 {strides = array<i32>} : memref<8x1xf32, #tpu.memory_space<vmem>>, vector<8x1xf32>,
      %cst_20 = arith.constant 0.000000e+00 : f32
      %33 = vector.broadcast %cst_20 : f32 to vector<8x1xf32>
      %c0_21 = arith.constant 0 : index
      %c0_22 = arith.constant 0 : index
      %34 = vector.load %arg6[%c0_21, %c0_22] : memref<8x1xf32, #tpu.memory_space<vmem>>, vector<8x1xf32>
      tpu.vector_store %arg6[%c0_21, %c0_22], %33 {strides = array<i32>} : memref<8x1xf32, #tpu.memory_space<vmem>>, vector<8x1xf32>,
    } else {
    }
    %c0 = arith.constant 0 : index
    %c0_1 = arith.constant 0 : index
    %3 = vector.load %arg2[%c0, %c0_1] : memref<8x32xbf16, #tpu.memory_space<vmem>>, vector<8x32xbf16>
    %c0_2 = arith.constant 0 : index
    %c0_3 = arith.constant 0 : index
    %4 = vector.load %arg3[%c0_2, %c0_3] : memref<8x32xbf16, #tpu.memory_space<vmem>>, vector<8x32xbf16>
    %cst = arith.constant dense<0.000000e+00> : vector<8x8xf32>
    %5 = tpu.matmul %3, %4, %cst {dimension_numbers = #tpu.dot_dimension_numbers<[1], [1], [0], [0], [0, 0, 1, 0], [], []>} : vector<8x32xbf16>, vector<8x32xbf16>, vector<8x8xf32> -> vector<8x8xf32>
    %6 = arith.subi %arg1, %arg0 : i32
    %c8_i32 = arith.constant 8 : i32
    %7 = arith.muli %6, %c8_i32 : i32
    %c8_i32_4 = arith.constant 8 : i32
    %8 = arith.subi %c8_i32_4, %7 : i32
    %9 = math.absi %8 : i32
    %c8_i32_5 = arith.constant 8 : i32
    %10 = arith.cmpi slt, %9, %c8_i32_5 : i32
    %c8_i32_6 = arith.constant 8 : i32
    %11 = arith.addi %c8_i32_6, %7 : i32
    %12 = math.absi %11 : i32
    %c8_i32_7 = arith.constant 8 : i32
    %13 = arith.cmpi slt, %12, %c8_i32_7 : i32
    %14 = arith.ori %10, %13 : i1
    %15 = arith.extui %14 : i1 to i32
    %c0_i32_8 = arith.constant 0 : i32
    %16 = arith.cmpi ne, %15, %c0_i32_8 : i32
    scf.if %16 {
      %31 = tpu.iota {dimensions = array<i32: 0>} : vector<8x8xi32>
      %32 = tpu.iota {dimensions = array<i32: 1>} : vector<8x8xi32>
      %33 = arith.subi %32, %31 : vector<8x8xi32>
      %c8_i32_17 = arith.constant 8 : i32
      %34 = arith.subi %c8_i32_17, %7 : i32
      %35 = vector.broadcast %34 : i32 to vector<8x8xi32>
      %36 = arith.cmpi eq, %33, %35 : vector<8x8xi32>
      %c-8_i32 = arith.constant -8 : i32
      %37 = arith.subi %c-8_i32, %7 : i32
      %38 = vector.broadcast %37 : i32 to vector<8x8xi32>
      %39 = arith.cmpi eq, %33, %38 : vector<8x8xi32>
      %40 = arith.ori %36, %39 : vector<8x8xi1>
      %c0_18 = arith.constant 0 : index
      %c0_19 = arith.constant 0 : index
      %41 = vector.load %arg5[%c0_18, %c0_19] : memref<8x1xf32, #tpu.memory_space<vmem>>, vector<8x1xf32>
      %cst_20 = arith.constant 0.000000e+00 : f32
      %42 = vector.broadcast %cst_20 : f32 to vector<8x8xf32>
      %43 = arith.select %40, %5, %42 : vector<8x8xi1>, vector<8x8xf32>
      %cst_21 = arith.constant dense<0.000000e+00> : vector<8xf32>
      %44 = vector.multi_reduction <add>, %43, %cst_21 [1] : vector<8x8xf32> to vector<8xf32>
      %45 = vector.shape_cast %44 : vector<8xf32> to vector<8x1xf32>
      %46 = arith.addf %41, %45 : vector<8x1xf32>
      %c0_22 = arith.constant 0 : index
      %c0_23 = arith.constant 0 : index
      %47 = vector.load %arg5[%c0_22, %c0_23] : memref<8x1xf32, #tpu.memory_space<vmem>>, vector<8x1xf32>
      tpu.vector_store %arg5[%c0_22, %c0_23], %46 {strides = array<i32>} : memref<8x1xf32, #tpu.memory_space<vmem>>, vector<8x1xf32>,
    } else {
    }
    %cst_9 = arith.constant 2.000000e+00 : f32
    %17 = vector.broadcast %cst_9 : f32 to vector<8x8xf32>
    %18 = arith.subf %5, %17 : vector<8x8xf32>
    %19 = math.exp %18 : vector<8x8xf32>
    %c0_10 = arith.constant 0 : index
    %c0_11 = arith.constant 0 : index
    %20 = vector.load %arg6[%c0_10, %c0_11] : memref<8x1xf32, #tpu.memory_space<vmem>>, vector<8x1xf32>
    %cst_12 = arith.constant dense<0.000000e+00> : vector<8xf32>
    %21 = vector.multi_reduction <add>, %19, %cst_12 [1] : vector<8x8xf32> to vector<8xf32>
    %22 = vector.shape_cast %21 : vector<8xf32> to vector<8x1xf32>
    %23 = arith.addf %20, %22 : vector<8x1xf32>
    %c0_13 = arith.constant 0 : index
    %c0_14 = arith.constant 0 : index
    %24 = vector.load %arg6[%c0_13, %c0_14] : memref<8x1xf32, #tpu.memory_space<vmem>>, vector<8x1xf32>
    tpu.vector_store %arg6[%c0_13, %c0_14], %23 {strides = array<i32>} : memref<8x1xf32, #tpu.memory_space<vmem>>, vector<8x1xf32>,
    %25 = arith.cmpi eq, %arg0, %arg1 : i32
    %26 = arith.extui %25 : i1 to i32
    %c0_i32_15 = arith.constant 0 : i32
    %27 = arith.cmpi ne, %26, %c0_i32_15 : i32
    scf.if %27 {
      %31 = tpu.iota {dimensions = array<i32: 0>} : vector<8x8xi32>
      %32 = tpu.iota {dimensions = array<i32: 1>} : vector<8x8xi32>
      %33 = arith.cmpi eq, %31, %32 : vector<8x8xi32>
      %cst_17 = arith.constant 0.000000e+00 : f32
      %34 = vector.broadcast %cst_17 : f32 to vector<8x8xf32>
      %35 = arith.select %33, %19, %34 : vector<8x8xi1>, vector<8x8xf32>
      %cst_18 = arith.constant dense<0.000000e+00> : vector<8xf32>
      %36 = vector.multi_reduction <add>, %35, %cst_18 [1] : vector<8x8xf32> to vector<8xf32>
      %37 = vector.shape_cast %36 : vector<8xf32> to vector<8x1xf32>
      %c0_19 = arith.constant 0 : index
      %c0_20 = arith.constant 0 : index
      %38 = vector.load %arg6[%c0_19, %c0_20] : memref<8x1xf32, #tpu.memory_space<vmem>>, vector<8x1xf32>
      %39 = arith.subf %38, %37 : vector<8x1xf32>
      %c0_21 = arith.constant 0 : index
      %c0_22 = arith.constant 0 : index
      %40 = vector.load %arg6[%c0_21, %c0_22] : memref<8x1xf32, #tpu.memory_space<vmem>>, vector<8x1xf32>
      tpu.vector_store %arg6[%c0_21, %c0_22], %39 {strides = array<i32>} : memref<8x1xf32, #tpu.memory_space<vmem>>, vector<8x1xf32>,
    } else {
    }
    %c1_i32 = arith.constant 1 : i32
    %28 = arith.cmpi eq, %arg1, %c1_i32 : i32
    %29 = arith.extui %28 : i1 to i32
    %c0_i32_16 = arith.constant 0 : i32
    %30 = arith.cmpi ne, %29, %c0_i32_16 : i32
    scf.if %30 {
      %c0_17 = arith.constant 0 : index
      %c0_18 = arith.constant 0 : index
      %31 = vector.load %arg6[%c0_17, %c0_18] : memref<8x1xf32, #tpu.memory_space<vmem>>, vector<8x1xf32>
      %32 = math.log %31 : vector<8x1xf32>
      %cst_19 = arith.constant 2.000000e+00 : f32
      %33 = vector.broadcast %cst_19 : f32 to vector<8x1xf32>
      %34 = arith.addf %33, %32 : vector<8x1xf32>
      %c0_20 = arith.constant 0 : index
      %c0_21 = arith.constant 0 : index
      %35 = vector.load %arg5[%c0_20, %c0_21] : memref<8x1xf32, #tpu.memory_space<vmem>>, vector<8x1xf32>
      %36 = arith.subf %34, %35 : vector<8x1xf32>
      %c0_22 = arith.constant 0 : index
      %c0_23 = arith.constant 0 : index
      %37 = vector.load %arg4[%c0_22, %c0_23] : memref<8x1xf32, #tpu.memory_space<vmem>>, vector<8x1xf32>
      tpu.vector_store %arg4[%c0_22, %c0_23], %36 {strides = array<i32>} : memref<8x1xf32, #tpu.memory_space<vmem>>, vector<8x1xf32>,
    } else {
    }
    return
  }
  func.func @transform_0(%arg0: i32, %arg1: i32) -> (i32, i32) {
    %c0_i32 = arith.constant 0 : i32
    %c0_i32_0 = arith.constant 0 : i32
    return %arg0, %c0_i32 : i32, i32
  }
  func.func @transform_1(%arg0: i32, %arg1: i32) -> (i32, i32) {
    %c0_i32 = arith.constant 0 : i32
    %c0_i32_0 = arith.constant 0 : i32
    return %arg1, %c0_i32 : i32, i32
  }
  func.func @transform_2(%arg0: i32, %arg1: i32) -> (i32, i32) {
    %c0_i32 = arith.constant 0 : i32
    %c0_i32_0 = arith.constant 0 : i32
    return %arg0, %c0_i32 : i32, i32
  }
}

</mosaic_0001>

<llo_original>
// kernel: tpu_custom_call.1
$region0: #{tpu_custom_call.1}
  #allocation0 [shape = 'u32[]', space=smem, size = 0x4, offset = 0x4, fixed_abs, tag = 'smem constant byte address 0x4 - core index']
  #allocation1 [shape = 'u32[72,128]{1,0:T(1,128)}', space=vmem, size = 0x9000, scoped, tag = 'internal scratch']
  #allocation2 [shape = 'f32[8,1]{1,0:T(8,128)}', space=vmem, size = 0x1000, scoped, tag = 'scratch operand']
  #allocation3 [shape = 'f32[8,1]{1,0:T(8,128)}', space=vmem, size = 0x1000, scoped, tag = 'scratch operand']
  #allocation4 [shape = 'f32[8,1]{1,0:T(8,128)}', space=vmem, size = 0x1000, scoped, tag = 'scratch operand']
  %s0 = inlined_call_operand.hbm [shape: bf16[16,32], index: 0, kind: input, shape index: {}]
  %s1 = inlined_call_operand.hbm [shape: bf16[16,32], index: 1, kind: input, shape index: {}]
  %s2 = inlined_call_operand.vmem [shape: f32[16,1], index: 2, kind: output, shape index: {}]
  %s3 = sld [smem:[#allocation0]]
  $region65: #{tpu_custom_call.1} parent=0
    _
  %s5 = ssub.s32 1, %s3
  %s6 = scalar_select 0, %s5, %s3
  $region1: #{tpu_custom_call.1} parent=0
    #allocation5 [shape = 'u8[4096]{0}', space=vmem, size = 0x1000, scoped, tag = 'input window, operand 0']
    #allocation6 [shape = 's32[2]{0}', space=sflag, size = 0x8, scoped, tag = 'scoped memory for tpu_custom_call.1']
    #allocation7 [shape = 'u8[4096]{0}', space=vmem, size = 0x1000, scoped, tag = 'input window, operand 1']
    #allocation8 [shape = 's32[2]{0}', space=sflag, size = 0x8, scoped, tag = 'scoped memory for tpu_custom_call.1']
    %7 = vsyncpa [#allocation6], 0
    %s8 = scalar_lea.sflag [#allocation6], 1
    %9 = vsyncpa %s8, 0
    %10 = vsyncpa [#allocation8], 0
    %s11 = scalar_lea.sflag [#allocation8], 1
    %12 = vsyncpa %s11, 0
    loop: start=0, step=1, limit=6
    $region2: #{tpu_custom_call.1} parent=1 // loop_pre_header
      _
    $region3: #{tpu_custom_call.1} parent=1 // loop_header
      %s14 = sphi 0, %s18
      %p15 = scmp.ge.s32.totalorder %s14, 6
      %s21 = sphi 0, %s33
      %s22 = sphi 0, %s29
      %s23 = sphi 0, %s21
      %s24 = sphi 0, %s22
      %s25 = sphi 0, %s23
      %s26 = sphi 0, %s24
      %s36 = sphi 0, %s38
      %s39 = sphi 0, %s36
      %s40 = sphi 0, %s39
      %s56 = sphi 0, %s40
      %s62 = sphi 0, %s64
      %s65 = sphi 0, %s62
      %s66 = sphi 0, %s65
      %s82 = sphi 0, %s66
      %s88 = sphi 0, %s90
      %s91 = sphi 0, %s88
      %s92 = sphi 0, %s91
      %s108 = sphi 0, %s92
    $region4: #{tpu_custom_call.1} parent=1 // loop_header_branch
      %17 = sbr.rel (%p15) target = $region8
    $region5: #{tpu_custom_call.1} parent=1 // loop_body
      %s19 = ssub.s32 %s14, 1
      %s20 = ssub.s32 %s14, 2
      %s27 = sadd.s32 1, %s22
      %p28 = scmp.ge.s32.totalorder %s27, 2
      %s29 = scalar_select %p28, 0, %s27
      %s30 = sadd.s32 1, %s21
      %s31 = scalar_select %p28, %s30, %s21
      %p32 = scmp.ge.s32.totalorder %s31, 2
      %s33 = scalar_select %p32, 0, %s31
      %s34 = ssub.s32 %s21, %s33
      %p35 = scmp.eq.s32.totalorder %s34, 0
      %s37 = sadd.s32 %s36, 1
      %s38 = scalar_select %p35, %s36, %s37
      %p41 = pneg %p35
      %p42 = scmp.eq.s32.totalorder %s14, 3
      %p43 = por %p41, %p42
      %p44 = scmp.ne.s32.totalorder %s36, %s39
      %p45 = scmp.eq.s32.totalorder %s14, 0
      %p46 = por %p44, %p45
      %p47 = scmp.ne.s32.totalorder %s36, %s39
      %p48 = scmp.eq.s32.totalorder %s19, 3
      %p49 = por %p47, %p48
      %p50 = scmp.ne.s32.totalorder %s39, %s40
      %p51 = scmp.eq.s32.totalorder %s19, 0
      %p52 = por %p50, %p51
      %p53 = scmp.ne.s32.totalorder %s39, %s40
      %p54 = scmp.eq.s32.totalorder %s20, 3
      %p55 = por %p53, %p54
      %p57 = scmp.ne.s32.totalorder %s40, %s56
      %p58 = scmp.eq.s32.totalorder %s20, 0
      %p59 = por %p57, %p58
      %s60 = ssub.s32 %s22, %s29
      %p61 = scmp.eq.s32.totalorder %s60, 0
      %s63 = sadd.s32 %s62, 1
      %s64 = scalar_select %p61, %s62, %s63
      %p67 = pneg %p61
      %p68 = scmp.eq.s32.totalorder %s14, 3
      %p69 = por %p67, %p68
      %p70 = scmp.ne.s32.totalorder %s62, %s65
      %p71 = scmp.eq.s32.totalorder %s14, 0
      %p72 = por %p70, %p71
      %p73 = scmp.ne.s32.totalorder %s62, %s65
      %p74 = scmp.eq.s32.totalorder %s19, 3
      %p75 = por %p73, %p74
      %p76 = scmp.ne.s32.totalorder %s65, %s66
      %p77 = scmp.eq.s32.totalorder %s19, 0
      %p78 = por %p76, %p77
      %p79 = scmp.ne.s32.totalorder %s65, %s66
      %p80 = scmp.eq.s32.totalorder %s20, 3
      %p81 = por %p79, %p80
      %p83 = scmp.ne.s32.totalorder %s66, %s82
      %p84 = scmp.eq.s32.totalorder %s20, 0
      %p85 = por %p83, %p84
      %s86 = ssub.s32 %s21, %s33
      %p87 = scmp.eq.s32.totalorder %s86, 0
      %s89 = sadd.s32 %s88, 1
      %s90 = scalar_select %p87, %s88, %s89
      %p93 = pneg %p87
      %p94 = scmp.eq.s32.totalorder %s14, 3
      %p95 = por %p93, %p94
      %p96 = scmp.ne.s32.totalorder %s88, %s91
      %p97 = scmp.eq.s32.totalorder %s14, 0
      %p98 = por %p96, %p97
      %p99 = scmp.ne.s32.totalorder %s88, %s91
      %p100 = scmp.eq.s32.totalorder %s19, 3
      %p101 = por %p99, %p100
      %p102 = scmp.ne.s32.totalorder %s91, %s92
      %p103 = scmp.eq.s32.totalorder %s19, 0
      %p104 = por %p102, %p103
      %p105 = scmp.ne.s32.totalorder %s91, %s92
      %p106 = scmp.eq.s32.totalorder %s20, 3
      %p107 = por %p105, %p106
      %p109 = scmp.ne.s32.totalorder %s92, %s108
      %p110 = scmp.eq.s32.totalorder %s20, 0
      %p111 = por %p109, %p110
      %p112 = scmp.le.s32.totalorder 1, %s14
      %p113 = scmp.lt.s32.totalorder %s14, 5
      %p114 = pnand %p112, %p113
      %p115 = pneg %p114
      // Predicated region
      $region9: #{tpu_custom_call.1} parent=5 // pred_check
        _
      $region10: #{tpu_custom_call.1} parent=5 // pred_check_branch
        %117 = sbr.rel (%p114) target = $region12
      $region11: #{tpu_custom_call.1} parent=5 // pred_region
        %s118 = ssub.s32 %s14, 1
      $region12: #{tpu_custom_call.1} parent=5 // pred_fallthru
        _
      %p119 = scmp.lt.s32.totalorder %s14, 4
      // Predicated region
      $region13: #{tpu_custom_call.1} parent=5 // pred_check
        %p120 = pneg %p119
      $region14: #{tpu_custom_call.1} parent=5 // pred_check_branch
        %122 = sbr.rel (%p120) target = $region16
      $region15: #{tpu_custom_call.1} parent=5 // pred_region
        // Predicated region
        $region17: #{tpu_custom_call.1} parent=15 // pred_check
          %p123 = pneg %p46
        $region18: #{tpu_custom_call.1} parent=15 // pred_check_branch
          %125 = sbr.rel (%p123) target = $region20
        $region19: #{tpu_custom_call.1} parent=15 // pred_region
          %s126 = sand.u32 %s36, 1
          %s127 = scalar_lea.sflag [#allocation6], %s126
          %s128 = sand.u32 %s36, 1
          %s129 = smul.addr %s128, 4
          %s130 = scalar_lea.vmem [#allocation5], %s129
          %132 = vsyncadd %s127, 0
          %s133 = smul.addr %s21, 4
          %s134 = scalar_lea.hbm %s0, %s133
          %s136 = sshll.u32 %s134, 4
          %s137 = int_to_ptr.hbm [resolvable:$true] %s136
          %s138 = sshll.u32 %s130, 4
          %s139 = int_to_ptr.vmem [resolvable:$true] %s138
          %141 = dma.hbm_to_vmem [thread:$0]  %s137, 64, %s139, %s127
        $region20: #{tpu_custom_call.1} parent=15 // pred_fallthru
          _
        // Predicated region
        $region21: #{tpu_custom_call.1} parent=15 // pred_check
          %p142 = pneg %p72
        $region22: #{tpu_custom_call.1} parent=15 // pred_check_branch
          %144 = sbr.rel (%p142) target = $region24
        $region23: #{tpu_custom_call.1} parent=15 // pred_region
          %s145 = sand.u32 %s62, 1
          %s146 = scalar_lea.sflag [#allocation8], %s145
          %s147 = sand.u32 %s62, 1
          %s148 = smul.addr %s147, 4
          %s149 = scalar_lea.vmem [#allocation7], %s148
          %151 = vsyncadd %s146, 0
          %s152 = smul.addr %s22, 4
          %s153 = scalar_lea.hbm %s1, %s152
          %s155 = sshll.u32 %s153, 4
          %s156 = int_to_ptr.hbm [resolvable:$true] %s155
          %s157 = sshll.u32 %s149, 4
          %s158 = int_to_ptr.vmem [resolvable:$true] %s157
          %160 = dma.hbm_to_vmem [thread:$0]  %s156, 64, %s158, %s146
        $region24: #{tpu_custom_call.1} parent=15 // pred_fallthru
          _
      $region16: #{tpu_custom_call.1} parent=5 // pred_fallthru
        _
      %p161 = scmp.le.s32.totalorder 1, %s14
      %p162 = scmp.lt.s32.totalorder %s14, 5
      %p163 = pnand %p161, %p162
      %p164 = pneg %p163
      // Predicated region
      $region25: #{tpu_custom_call.1} parent=5 // pred_check
        _
      $region26: #{tpu_custom_call.1} parent=5 // pred_check_branch
        %166 = sbr.rel (%p163) target = $region28
      $region27: #{tpu_custom_call.1} parent=5 // pred_region
        %s167 = ssub.s32 %s14, 1
        %s168 = sand.u32 %s39, 1
        %s169 = scalar_lea.sflag [#allocation6], %s168
        %s170 = sand.u32 %s39, 1
        %s171 = smul.addr %s170, 4
        %s172 = scalar_lea.vmem [#allocation5], %s171
        // Predicated region
        $region29: #{tpu_custom_call.1} parent=27 // pred_check
          %p173 = pneg %p52
        $region30: #{tpu_custom_call.1} parent=27 // pred_check_branch
          %175 = sbr.rel (%p173) target = $region32
        $region31: #{tpu_custom_call.1} parent=27 // pred_region
          %177 = dma.done %s169, 64
        $region32: #{tpu_custom_call.1} parent=27 // pred_fallthru
          _
        %s178 = sand.u32 %s65, 1
        %s179 = scalar_lea.sflag [#allocation8], %s178
        %s180 = sand.u32 %s65, 1
        %s181 = smul.addr %s180, 4
        %s182 = scalar_lea.vmem [#allocation7], %s181
        // Predicated region
        $region33: #{tpu_custom_call.1} parent=27 // pred_check
          %p183 = pneg %p78
        $region34: #{tpu_custom_call.1} parent=27 // pred_check_branch
          %185 = sbr.rel (%p183) target = $region36
        $region35: #{tpu_custom_call.1} parent=27 // pred_region
          %187 = dma.done %s179, 64
        $region36: #{tpu_custom_call.1} parent=27 // pred_fallthru
          _
        %s188 = sand.u32 %s39, 1
        %s189 = scalar_lea.sflag [#allocation6], %s188
        %s190 = sand.u32 %s39, 1
        %s191 = smul.addr %s190, 4
        %s192 = scalar_lea.vmem [#allocation5], %s191
        %p193 = pneg %p52
        %p194 = pneg %p49
        %s195 = sand.u32 %s65, 1
        %s196 = scalar_lea.sflag [#allocation8], %s195
        %s197 = sand.u32 %s65, 1
        %s198 = smul.addr %s197, 4
        %s199 = scalar_lea.vmem [#allocation7], %s198
        %p200 = pneg %p78
        %p201 = pneg %p75
        %p202 = pneg %p104
        %p203 = pneg %p101
        %p204 = scmp.lt.s32.totalorder %s23, 1
        %s205 = scalar_select %p204, %s23, 1
        %s206 = smul.addr %s205, 8
        %s207 = scalar_lea.vmem %s2, %s206
        %p208 = scmp.lt.s32.totalorder %s23, 1
        %s209 = scalar_select %p208, %s23, 1
        %s210 = smul.addr %s209, 8
        %s211 = scalar_lea.vmem %s2, %s210
        %p213 = scmp.eq.s32.totalorder %s24, 0
        // Predicated region
        $region37: #{tpu_custom_call.1} parent=27 // pred_check
          %p214 = pneg %p213
        $region38: #{tpu_custom_call.1} parent=27 // pred_check_branch
          %216 = sbr.rel (%p214) target = $region40
        $region39: #{tpu_custom_call.1} parent=27 // pred_region
          %vm217 = vcmask 7168
          %218 = vst.msk [vmem:[#allocation2] sm:$0xff] %vm217, 0.0
          %219 = vst.msk [vmem:[#allocation3] sm:$0xff] %vm217, 0.0
        $region40: #{tpu_custom_call.1} parent=27 // pred_fallthru
          _
        %v220 = vld [vmem:[%s172] sm:$0xf]
        %v221 = vld [vmem:[%s182] sm:$0xf]
        %vm222 = vcmask 261120
        %v224 = vsel %vm222, %v220, 0
        %v227 = vsel %vm222, %v221, 0
        %229 = vmatpush.bf16.xpose.msra.mxu0 0
        %230 = vmatpush.bf16.xpose.msra.mxu0 0
        %231 = vmatpush.bf16.xpose.msra.mxu0 0
        %232 = vmatpush.bf16.xpose.msra.mxu0 0
        %233 = vmatpush.bf16.xpose.msra.mxu0 0
        %234 = vmatpush.bf16.xpose.msra.mxu0 0
        %235 = vmatpush.bf16.xpose.msra.mxu0 0
        %236 = vmatpush.bf16.xpose.msra.mxu0 %v227
        %237 = vmatmul.bf16.gmra.mxu0 %v224
        %v238 = vpop.f32.mrf.mxu0
        %v239 = vadd.f32 0.0, %v238
        %v240 = vpop.f32.mrf.mxu0
        %241 = vdwg.mxu0
        %s242 = ssub.s32 %s24, %s23
        %s243 = smul.u32 %s242, 8
        %s244 = ssub.s32 8, %s243
        %s245 = sshra.s32 %s244, 31
        %s246 = sadd.s32 %s244, %s245
        %s247 = sxor.u32 %s246, %s245
        %p248 = scmp.lt.s32.totalorder %s247, 8
        %s249 = sadd.s32 %s243, 8
        %s250 = sshra.s32 %s249, 31
        %s251 = sadd.s32 %s249, %s250
        %s252 = sxor.u32 %s251, %s250
        %p253 = scmp.lt.s32.totalorder %s252, 8
        %p254 = por %p248, %p253
        // Predicated region
        $region41: #{tpu_custom_call.1} parent=27 // pred_check
          %p255 = pneg %p254
        $region42: #{tpu_custom_call.1} parent=27 // pred_check_branch
          %257 = sbr.rel (%p255) target = $region44
        $region43: #{tpu_custom_call.1} parent=27 // pred_region
          %v258 = vlaneseq
          %v259 = vshrl.u32 %v258, 7
          %v260 = vlaneseq
          %v261 = vand.u32 %v260, 127
          %v262 = vsub.s32 %v261, %v259
          %v263 = vstv %s244
          %vm264 = vcmp.eq.s32.totalorder %v262, %v263
          %s265 = ssub.s32 4294967288, %s243
          %v266 = vstv %s265
          %vm267 = vcmp.eq.s32.totalorder %v262, %v266
          %vm268 = vmor %vm264, %vm267
          %v269 = vld [vmem:[#allocation2] sm:$0xff]
          %v270 = vsel %vm268, %v239, 0.0
          %vm271 = vcmask 64512
          %v272 = vsel %vm271, %v270, 0.0
          %273 = vadd.xlane.f32.xlu0 %v272
          %v274 = vpop.xlane.xlu0 %273
          %v275 = vadd.f32 %v269, %v274
          %vm276 = vcmask 7168
          %277 = vst.msk [vmem:[#allocation2] sm:$0xff] %vm276, %v275
        $region44: #{tpu_custom_call.1} parent=27 // pred_fallthru
          _
        %v278 = vsub.f32 %v239, 2.0
        %v279 = vmul.f32 %v278, 1.442695
        %v280 = vpow.pop %v279
        %v281 = vld [vmem:[#allocation3] sm:$0xff]
        %vm282 = vcmask 64512
        %v283 = vsel %vm282, %v280, 0.0
        %284 = vadd.xlane.f32.xlu0 %v283
        %v285 = vpop.xlane.xlu0 %284
        %v286 = vadd.f32 %v281, %v285
        %vm287 = vcmask 7168
        %288 = vst.msk [vmem:[#allocation3] sm:$0xff] %vm287, %v286
        %p289 = scmp.eq.s32.totalorder %s23, %s24
        // Predicated region
        $region45: #{tpu_custom_call.1} parent=27 // pred_check
          %p290 = pneg %p289
        $region46: #{tpu_custom_call.1} parent=27 // pred_check_branch
          %292 = sbr.rel (%p290) target = $region48
        $region47: #{tpu_custom_call.1} parent=27 // pred_region
          %v293 = vlaneseq
          %v294 = vshrl.u32 %v293, 7
          %v295 = vlaneseq
          %v296 = vand.u32 %v295, 127
          %vm297 = vcmp.eq.s32.totalorder %v294, %v296
          %v298 = vsel %vm297, %v280, 0.0
          %v299 = vsel %vm282, %v298, 0.0
          %300 = vadd.xlane.f32.xlu0 %v299
          %v301 = vpop.xlane.xlu0 %300
          %v302 = vld [vmem:[#allocation3] sm:$0xff]
          %v303 = vsub.f32 %v302, %v301
          %304 = vst.msk [vmem:[#allocation3] sm:$0xff] %vm287, %v303
        $region48: #{tpu_custom_call.1} parent=27 // pred_fallthru
          _
        %p305 = scmp.eq.s32.totalorder %s24, 1
        // Predicated region
        $region49: #{tpu_custom_call.1} parent=27 // pred_check
          %p306 = pneg %p305
        $region50: #{tpu_custom_call.1} parent=27 // pred_check_branch
          %308 = sbr.rel (%p306) target = $region52
        $region51: #{tpu_custom_call.1} parent=27 // pred_region
          %v309 = vld [vmem:[#allocation3] sm:$0xff]
          %v310 = vlog2.pop %v309
          %v311 = vmul.f32 %v310, 0.6931472
          %v312 = vadd.f32 %v311, 2.0
          %v313 = vld [vmem:[#allocation2] sm:$0xff]
          %v314 = vsub.f32 %v312, %v313
          %315 = vst.msk [vmem:[%s211] sm:$0xff] %vm287, %v314
        $region52: #{tpu_custom_call.1} parent=27 // pred_fallthru
          _
        %p316 = scmp.lt.s32.totalorder %s23, 1
        %s317 = scalar_select %p316, %s23, 1
        %s318 = smul.addr %s317, 8
        %s319 = scalar_lea.vmem %s2, %s318
        // Predicated region
        $region53: #{tpu_custom_call.1} parent=27 // pred_check
          %p320 = pneg %p101
        $region54: #{tpu_custom_call.1} parent=27 // pred_check_branch
          %322 = sbr.rel (%p320) target = $region56
        $region55: #{tpu_custom_call.1} parent=27 // pred_region
          _
        $region56: #{tpu_custom_call.1} parent=27 // pred_fallthru
          _
      $region28: #{tpu_custom_call.1} parent=5 // pred_fallthru
        _
      %p323 = scmp.le.s32.totalorder 2, %s14
      // Predicated region
      $region57: #{tpu_custom_call.1} parent=5 // pred_check
        %p324 = pneg %p323
      $region58: #{tpu_custom_call.1} parent=5 // pred_check_branch
        %326 = sbr.rel (%p324) target = $region60
      $region59: #{tpu_custom_call.1} parent=5 // pred_region
        %s327 = ssub.s32 %s14, 2
        // Predicated region
        $region61: #{tpu_custom_call.1} parent=59 // pred_check
          %p328 = pneg %p107
        $region62: #{tpu_custom_call.1} parent=59 // pred_check_branch
          %330 = sbr.rel (%p328) target = $region64
        $region63: #{tpu_custom_call.1} parent=59 // pred_region
          %p331 = scmp.lt.s32.totalorder %s25, 1
          %s332 = scalar_select %p331, %s25, 1
          %s333 = smul.addr %s332, 8
          %s334 = scalar_lea.vmem %s2, %s333
        $region64: #{tpu_custom_call.1} parent=59 // pred_fallthru
          _
      $region60: #{tpu_custom_call.1} parent=5 // pred_fallthru
        _
    $region6: #{tpu_custom_call.1} parent=1 // loop_footer
      %s18 = sadd.s32 1, %s14
    $region7: #{tpu_custom_call.1} parent=1 // loop_footer_branch
      %13 = sbr.rel target = $region3
    $region8: #{tpu_custom_call.1} parent=1 // loop_exit
      _
    %335 = vsyncpa [#allocation6], 1
    %s336 = scalar_lea.sflag [#allocation6], 1
    %337 = vsyncpa %s336, 1
    %338 = vsyncpa [#allocation8], 1
    %s339 = scalar_lea.sflag [#allocation8], 1
    %340 = vsyncpa %s339, 1

</llo_original>
